<compile_context>
chip_gen: v5e
topology: v5e:2x2
jax: 0.10.0
libtpu: 0.0.40
codegen_flags: <defaults>
</compile_context>

<pallas_src>
import jax
import jax.numpy as jnp
from jax import lax
from jax.experimental import pallas as pl
from jax.experimental.pallas import tpu as pltpu

# Conv hyper-parameters from the module __init__
CIN, COUT = 2, 4
KH, KW = 3, 4
GROUPS = 2
DIL = 2
PAD_H, PAD_W = 3, 0
OC_PER_G = COUT // GROUPS     # 2
IC_PER_G = CIN // GROUPS      # 1
N_TAPS = IC_PER_G * KH * KW   # taps per output channel (flat OIHW order)


def conv_sub_kernel(w_ref, x_ref, y_ref, o_ref):
    """Batch-in-lanes grouped dilated conv fused with subtraction.

       w_ref : (COUT*IC_PER_G*KH*KW,) SMEM   flat OIHW weights (scalar prefetch)
       x_ref : (CIN, H, W, NB)        VMEM   input slab, batch on the lane axis
       y_ref : (COUT, OH, OW, NB)     VMEM
       o_ref : (COUT, OH, OW, NB)     VMEM
    """
    _, H, W, NB = x_ref.shape
    _, OH, OW, _ = o_ref.shape

    # In-register zero padding along H only (PAD_W == 0).  Concatenation is
    # along a non-minor axis -> cheap; no VMEM scratch store/reload.
    x = x_ref[...]
    zpad = jnp.zeros((CIN, PAD_H, W, NB), x.dtype)
    xp = jnp.concatenate([zpad, x, zpad], axis=1)      # (CIN, H+2*PAD_H, W, NB)

    outs = []
    for g in range(GROUPS):
        accs = [None] * OC_PER_G
        # Each dilated tap is sliced once and consumed immediately by both
        # output channels of the group (no materialized tap list).
        for ci in range(IC_PER_G):
            for kh in range(KH):
                for kw in range(KW):
                    tap = xp[g * IC_PER_G + ci,
                             kh * DIL:kh * DIL + OH,
                             kw * DIL:kw * DIL + OW, :]          # (OH, OW, NB)
                    t = ci * KH * KW + kh * KW + kw
                    for j in range(OC_PER_G):
                        oc = g * OC_PER_G + j
                        contrib = tap * w_ref[oc * N_TAPS + t]
                        accs[j] = contrib if accs[j] is None else accs[j] + contrib
        outs.extend(accs)

    # One fused stack + subtract + store (lane-dense on the batch axis).
    o_ref[...] = jnp.stack(outs, axis=0) - y_ref[...]


def model_forward(x, w, y):
    """x: (N, CIN, H, W) f32, w: (COUT, IC_PER_G, KH, KW) f32,
       y: (N, COUT, OH, OW) f32  ->  conv(x) - y   (NCHW, f32)"""
    n, cin, h, wdt = x.shape
    assert cin == CIN and w.shape == (COUT, IC_PER_G, KH, KW)
    oh = h + 2 * PAD_H - (DIL * (KH - 1) + 1) + 1
    ow = wdt + 2 * PAD_W - (DIL * (KW - 1) + 1) + 1
    assert y.shape == (n, COUT, oh, ow)

    # Batch onto the lane (last) axis: lane-dense loads/stores, vectorized FMAs.
    x_t = jnp.transpose(x, (1, 2, 3, 0)).astype(jnp.float32)    # (CIN, H, W, N)
    y_t = jnp.transpose(y, (1, 2, 3, 0)).astype(jnp.float32)    # (COUT, OH, OW, N)
    w_flat = w.reshape(-1).astype(jnp.float32)

    # Batch tile: 128 images per grid step when the batch allows it (lane-dense
    # blocks, amortized per-step overhead, parallel grid for v7x's two TCs),
    # otherwise the whole (small) batch in a single step.
    nb = 128 if n % 128 == 0 else n
    grid = (n // nb,)

    flops = 2 * n * COUT * oh * ow * N_TAPS
    bytes_accessed = 4 * (x.size + w_flat.size + y.size + n * COUT * oh * ow)

    out_t = pl.pallas_call(
        conv_sub_kernel,
        out_shape=jax.ShapeDtypeStruct((COUT, oh, ow, n), jnp.float32),
        grid_spec=pltpu.PrefetchScalarGridSpec(
            num_scalar_prefetch=1,                     # w_flat -> SMEM once
            grid=grid,
            in_specs=[
                pl.BlockSpec((CIN, h, wdt, nb), lambda b, wref: (0, 0, 0, b)),
                pl.BlockSpec((COUT, oh, ow, nb), lambda b, wref: (0, 0, 0, b)),
            ],
            out_specs=pl.BlockSpec((COUT, oh, ow, nb),
                                   lambda b, wref: (0, 0, 0, b)),
        ),
        compiler_params=pltpu.CompilerParams(
            dimension_semantics=("parallel",)),
        cost_estimate=pl.CostEstimate(flops=flops, transcendentals=0,
                                      bytes_accessed=bytes_accessed),
    )(w_flat, x_t, y_t)

    return jnp.transpose(out_t, (3, 0, 1, 2))                   # back to NCHW


if __name__ == "__main__":
    key = jax.random.PRNGKey(0)
    kx, kw, ky = jax.random.split(key, 3)

    # Small shapes consistent with the module's forward:
    #   x (2, 2, 2, 10) -> conv output (2, 4, 4, 4), matching y (2, 4, 4, 4).
    n, h, wdt = 2, 2, 10
    x = jax.random.normal(kx, (n, CIN, h, wdt), dtype=jnp.float32)
    w = jax.random.normal(kw, (COUT, IC_PER_G, KH, KW), dtype=jnp.float32) * 0.1
    y = jax.random.normal(ky, (n, COUT, 4, 4), dtype=jnp.float32)

    out = jax.block_until_ready(model_forward(x, w, y))

    # Reference check with XLA's grouped dilated conv + subtract.
    ref = lax.conv_general_dilated(
        x, w, window_strides=(1, 1),
        padding=((PAD_H, PAD_H), (PAD_W, PAD_W)),
        rhs_dilation=(DIL, DIL),
        dimension_numbers=("NCHW", "OIHW", "NCHW"),
        feature_group_count=GROUPS) - y
    assert out.shape == (n, COUT, 4, 4)
    assert jnp.allclose(out, ref, atol=1e-4, rtol=1e-4), "mismatch vs reference"
    print("KERNEL_OK")
</pallas_src>

<mosaic_0001>
module attributes {stable_mosaic.version = 11 : i64} {
  func.func @conv_sub_kernel(%arg0: i32, %arg1: memref<48xf32, #tpu.memory_space<smem>>, %arg2: memref<2x2x10x2xf32, #tpu.memory_space<vmem>>, %arg3: memref<4x4x4x2xf32, #tpu.memory_space<vmem>>, %arg4: memref<4x4x4x2xf32, #tpu.memory_space<vmem>>) attributes {dimension_semantics = [#tpu.dimension_semantics<parallel>], iteration_bounds = array<i64: 1>, scalar_prefetch = 1 : i64, scratch_operands = 0 : i64, tpu.core_type = #tpu.core_type<tc>, window_params = [{transform_indices = @transform_0, window_bounds = array<i64: 2, 2, 10, 2>}, {transform_indices = @transform_1, window_bounds = array<i64: 4, 4, 4, 2>}, {transform_indices = @transform_2, window_bounds = array<i64: 4, 4, 4, 2>}]} {
    %c0 = arith.constant 0 : index
    %c0_0 = arith.constant 0 : index
    %c0_1 = arith.constant 0 : index
    %c0_2 = arith.constant 0 : index
    %0 = vector.load %arg2[%c0, %c0_0, %c0_1, %c0_2] : memref<2x2x10x2xf32, #tpu.memory_space<vmem>>, vector<2x2x10x2xf32>
    %cst = arith.constant 0.000000e+00 : f32
    %1 = vector.broadcast %cst : f32 to vector<2x3x10x2xf32>
    %2 = tpu.concatenate %1, %0, %1 in 1 : vector<2x3x10x2xf32>, vector<2x2x10x2xf32>, vector<2x3x10x2xf32> -> vector<2x8x10x2xf32>
    %3 = vector.extract_strided_slice %2 {offsets = [0, 0, 0, 0], sizes = [1, 4, 4, 2], strides = [1, 1, 1, 1]} : vector<2x8x10x2xf32> to vector<1x4x4x2xf32>
    %4 = vector.shape_cast %3 : vector<1x4x4x2xf32> to vector<4x4x2xf32>
    %c0_3 = arith.constant 0 : index
    %5 = memref.load %arg1[%c0_3] : memref<48xf32, #tpu.memory_space<smem>>
    %6 = vector.broadcast %5 : f32 to vector<4x4x2xf32>
    %7 = arith.mulf %4, %6 : vector<4x4x2xf32>
    %c12 = arith.constant 12 : index
    %8 = memref.load %arg1[%c12] : memref<48xf32, #tpu.memory_space<smem>>
    %9 = vector.broadcast %8 : f32 to vector<4x4x2xf32>
    %10 = arith.mulf %4, %9 : vector<4x4x2xf32>
    %11 = vector.extract_strided_slice %2 {offsets = [0, 0, 2, 0], sizes = [1, 4, 4, 2], strides = [1, 1, 1, 1]} : vector<2x8x10x2xf32> to vector<1x4x4x2xf32>
    %12 = vector.shape_cast %11 : vector<1x4x4x2xf32> to vector<4x4x2xf32>
    %c1 = arith.constant 1 : index
    %13 = memref.load %arg1[%c1] : memref<48xf32, #tpu.memory_space<smem>>
    %14 = vector.broadcast %13 : f32 to vector<4x4x2xf32>
    %15 = arith.mulf %12, %14 : vector<4x4x2xf32>
    %16 = arith.addf %7, %15 : vector<4x4x2xf32>
    %c13 = arith.constant 13 : index
    %17 = memref.load %arg1[%c13] : memref<48xf32, #tpu.memory_space<smem>>
    %18 = vector.broadcast %17 : f32 to vector<4x4x2xf32>
    %19 = arith.mulf %12, %18 : vector<4x4x2xf32>
    %20 = arith.addf %10, %19 : vector<4x4x2xf32>
    %21 = vector.extract_strided_slice %2 {offsets = [0, 0, 4, 0], sizes = [1, 4, 4, 2], strides = [1, 1, 1, 1]} : vector<2x8x10x2xf32> to vector<1x4x4x2xf32>
    %22 = vector.shape_cast %21 : vector<1x4x4x2xf32> to vector<4x4x2xf32>
    %c2 = arith.constant 2 : index
    %23 = memref.load %arg1[%c2] : memref<48xf32, #tpu.memory_space<smem>>
    %24 = vector.broadcast %23 : f32 to vector<4x4x2xf32>
    %25 = arith.mulf %22, %24 : vector<4x4x2xf32>
    %26 = arith.addf %16, %25 : vector<4x4x2xf32>
    %c14 = arith.constant 14 : index
    %27 = memref.load %arg1[%c14] : memref<48xf32, #tpu.memory_space<smem>>
    %28 = vector.broadcast %27 : f32 to vector<4x4x2xf32>
    %29 = arith.mulf %22, %28 : vector<4x4x2xf32>
    %30 = arith.addf %20, %29 : vector<4x4x2xf32>
    %31 = vector.extract_strided_slice %2 {offsets = [0, 0, 6, 0], sizes = [1, 4, 4, 2], strides = [1, 1, 1, 1]} : vector<2x8x10x2xf32> to vector<1x4x4x2xf32>
    %32 = vector.shape_cast %31 : vector<1x4x4x2xf32> to vector<4x4x2xf32>
    %c3 = arith.constant 3 : index
    %33 = memref.load %arg1[%c3] : memref<48xf32, #tpu.memory_space<smem>>
    %34 = vector.broadcast %33 : f32 to vector<4x4x2xf32>
    %35 = arith.mulf %32, %34 : vector<4x4x2xf32>
    %36 = arith.addf %26, %35 : vector<4x4x2xf32>
    %c15 = arith.constant 15 : index
    %37 = memref.load %arg1[%c15] : memref<48xf32, #tpu.memory_space<smem>>
    %38 = vector.broadcast %37 : f32 to vector<4x4x2xf32>
    %39 = arith.mulf %32, %38 : vector<4x4x2xf32>
    %40 = arith.addf %30, %39 : vector<4x4x2xf32>
    %41 = vector.extract_strided_slice %2 {offsets = [0, 2, 0, 0], sizes = [1, 4, 4, 2], strides = [1, 1, 1, 1]} : vector<2x8x10x2xf32> to vector<1x4x4x2xf32>
    %42 = vector.shape_cast %41 : vector<1x4x4x2xf32> to vector<4x4x2xf32>
    %c4 = arith.constant 4 : index
    %43 = memref.load %arg1[%c4] : memref<48xf32, #tpu.memory_space<smem>>
    %44 = vector.broadcast %43 : f32 to vector<4x4x2xf32>
    %45 = arith.mulf %42, %44 : vector<4x4x2xf32>
    %46 = arith.addf %36, %45 : vector<4x4x2xf32>
    %c16 = arith.constant 16 : index
    %47 = memref.load %arg1[%c16] : memref<48xf32, #tpu.memory_space<smem>>
    %48 = vector.broadcast %47 : f32 to vector<4x4x2xf32>
    %49 = arith.mulf %42, %48 : vector<4x4x2xf32>
    %50 = arith.addf %40, %49 : vector<4x4x2xf32>
    %51 = vector.extract_strided_slice %2 {offsets = [0, 2, 2, 0], sizes = [1, 4, 4, 2], strides = [1, 1, 1, 1]} : vector<2x8x10x2xf32> to vector<1x4x4x2xf32>
    %52 = vector.shape_cast %51 : vector<1x4x4x2xf32> to vector<4x4x2xf32>
    %c5 = arith.constant 5 : index
    %53 = memref.load %arg1[%c5] : memref<48xf32, #tpu.memory_space<smem>>
    %54 = vector.broadcast %53 : f32 to vector<4x4x2xf32>
    %55 = arith.mulf %52, %54 : vector<4x4x2xf32>
    %56 = arith.addf %46, %55 : vector<4x4x2xf32>
    %c17 = arith.constant 17 : index
    %57 = memref.load %arg1[%c17] : memref<48xf32, #tpu.memory_space<smem>>
    %58 = vector.broadcast %57 : f32 to vector<4x4x2xf32>
    %59 = arith.mulf %52, %58 : vector<4x4x2xf32>
    %60 = arith.addf %50, %59 : vector<4x4x2xf32>
    %61 = vector.extract_strided_slice %2 {offsets = [0, 2, 4, 0], sizes = [1, 4, 4, 2], strides = [1, 1, 1, 1]} : vector<2x8x10x2xf32> to vector<1x4x4x2xf32>
    %62 = vector.shape_cast %61 : vector<1x4x4x2xf32> to vector<4x4x2xf32>
    %c6 = arith.constant 6 : index
    %63 = memref.load %arg1[%c6] : memref<48xf32, #tpu.memory_space<smem>>
    %64 = vector.broadcast %63 : f32 to vector<4x4x2xf32>
    %65 = arith.mulf %62, %64 : vector<4x4x2xf32>
    %66 = arith.addf %56, %65 : vector<4x4x2xf32>
    %c18 = arith.constant 18 : index
    %67 = memref.load %arg1[%c18] : memref<48xf32, #tpu.memory_space<smem>>
    %68 = vector.broadcast %67 : f32 to vector<4x4x2xf32>
    %69 = arith.mulf %62, %68 : vector<4x4x2xf32>
    %70 = arith.addf %60, %69 : vector<4x4x2xf32>
    %71 = vector.extract_strided_slice %2 {offsets = [0, 2, 6, 0], sizes = [1, 4, 4, 2], strides = [1, 1, 1, 1]} : vector<2x8x10x2xf32> to vector<1x4x4x2xf32>
    %72 = vector.shape_cast %71 : vector<1x4x4x2xf32> to vector<4x4x2xf32>
    %c7 = arith.constant 7 : index
    %73 = memref.load %arg1[%c7] : memref<48xf32, #tpu.memory_space<smem>>
    %74 = vector.broadcast %73 : f32 to vector<4x4x2xf32>
    %75 = arith.mulf %72, %74 : vector<4x4x2xf32>
    %76 = arith.addf %66, %75 : vector<4x4x2xf32>
    %c19 = arith.constant 19 : index
    %77 = memref.load %arg1[%c19] : memref<48xf32, #tpu.memory_space<smem>>
    %78 = vector.broadcast %77 : f32 to vector<4x4x2xf32>
    %79 = arith.mulf %72, %78 : vector<4x4x2xf32>
    %80 = arith.addf %70, %79 : vector<4x4x2xf32>
    %81 = vector.extract_strided_slice %2 {offsets = [0, 4, 0, 0], sizes = [1, 4, 4, 2], strides = [1, 1, 1, 1]} : vector<2x8x10x2xf32> to vector<1x4x4x2xf32>
    %82 = vector.shape_cast %81 : vector<1x4x4x2xf32> to vector<4x4x2xf32>
    %c8 = arith.constant 8 : index
    %83 = memref.load %arg1[%c8] : memref<48xf32, #tpu.memory_space<smem>>
    %84 = vector.broadcast %83 : f32 to vector<4x4x2xf32>
    %85 = arith.mulf %82, %84 : vector<4x4x2xf32>
    %86 = arith.addf %76, %85 : vector<4x4x2xf32>
    %c20 = arith.constant 20 : index
    %87 = memref.load %arg1[%c20] : memref<48xf32, #tpu.memory_space<smem>>
    %88 = vector.broadcast %87 : f32 to vector<4x4x2xf32>
    %89 = arith.mulf %82, %88 : vector<4x4x2xf32>
    %90 = arith.addf %80, %89 : vector<4x4x2xf32>
    %91 = vector.extract_strided_slice %2 {offsets = [0, 4, 2, 0], sizes = [1, 4, 4, 2], strides = [1, 1, 1, 1]} : vector<2x8x10x2xf32> to vector<1x4x4x2xf32>
    %92 = vector.shape_cast %91 : vector<1x4x4x2xf32> to vector<4x4x2xf32>
    %c9 = arith.constant 9 : index
    %93 = memref.load %arg1[%c9] : memref<48xf32, #tpu.memory_space<smem>>
    %94 = vector.broadcast %93 : f32 to vector<4x4x2xf32>
    %95 = arith.mulf %92, %94 : vector<4x4x2xf32>
    %96 = arith.addf %86, %95 : vector<4x4x2xf32>
    %c21 = arith.constant 21 : index
    %97 = memref.load %arg1[%c21] : memref<48xf32, #tpu.memory_space<smem>>
    %98 = vector.broadcast %97 : f32 to vector<4x4x2xf32>
    %99 = arith.mulf %92, %98 : vector<4x4x2xf32>
    %100 = arith.addf %90, %99 : vector<4x4x2xf32>
    %101 = vector.extract_strided_slice %2 {offsets = [0, 4, 4, 0], sizes = [1, 4, 4, 2], strides = [1, 1, 1, 1]} : vector<2x8x10x2xf32> to vector<1x4x4x2xf32>
    %102 = vector.shape_cast %101 : vector<1x4x4x2xf32> to vector<4x4x2xf32>
    %c10 = arith.constant 10 : index
    %103 = memref.load %arg1[%c10] : memref<48xf32, #tpu.memory_space<smem>>
    %104 = vector.broadcast %103 : f32 to vector<4x4x2xf32>
    %105 = arith.mulf %102, %104 : vector<4x4x2xf32>
    %106 = arith.addf %96, %105 : vector<4x4x2xf32>
    %c22 = arith.constant 22 : index
    %107 = memref.load %arg1[%c22] : memref<48xf32, #tpu.memory_space<smem>>
    %108 = vector.broadcast %107 : f32 to vector<4x4x2xf32>
    %109 = arith.mulf %102, %108 : vector<4x4x2xf32>
    %110 = arith.addf %100, %109 : vector<4x4x2xf32>
    %111 = vector.extract_strided_slice %2 {offsets = [0, 4, 6, 0], sizes = [1, 4, 4, 2], strides = [1, 1, 1, 1]} : vector<2x8x10x2xf32> to vector<1x4x4x2xf32>
    %112 = vector.shape_cast %111 : vector<1x4x4x2xf32> to vector<4x4x2xf32>
    %c11 = arith.constant 11 : index
    %113 = memref.load %arg1[%c11] : memref<48xf32, #tpu.memory_space<smem>>
    %114 = vector.broadcast %113 : f32 to vector<4x4x2xf32>
    %115 = arith.mulf %112, %114 : vector<4x4x2xf32>
    %116 = arith.addf %106, %115 : vector<4x4x2xf32>
    %c23 = arith.constant 23 : index
    %117 = memref.load %arg1[%c23] : memref<48xf32, #tpu.memory_space<smem>>
    %118 = vector.broadcast %117 : f32 to vector<4x4x2xf32>
    %119 = arith.mulf %112, %118 : vector<4x4x2xf32>
    %120 = arith.addf %110, %119 : vector<4x4x2xf32>
    %121 = vector.extract_strided_slice %2 {offsets = [1, 0, 0, 0], sizes = [1, 4, 4, 2], strides = [1, 1, 1, 1]} : vector<2x8x10x2xf32> to vector<1x4x4x2xf32>
    %122 = vector.shape_cast %121 : vector<1x4x4x2xf32> to vector<4x4x2xf32>
    %c24 = arith.constant 24 : index
    %123 = memref.load %arg1[%c24] : memref<48xf32, #tpu.memory_space<smem>>
    %124 = vector.broadcast %123 : f32 to vector<4x4x2xf32>
    %125 = arith.mulf %122, %124 : vector<4x4x2xf32>
    %c36 = arith.constant 36 : index
    %126 = memref.load %arg1[%c36] : memref<48xf32, #tpu.memory_space<smem>>
    %127 = vector.broadcast %126 : f32 to vector<4x4x2xf32>
    %128 = arith.mulf %122, %127 : vector<4x4x2xf32>
    %129 = vector.extract_strided_slice %2 {offsets = [1, 0, 2, 0], sizes = [1, 4, 4, 2], strides = [1, 1, 1, 1]} : vector<2x8x10x2xf32> to vector<1x4x4x2xf32>
    %130 = vector.shape_cast %129 : vector<1x4x4x2xf32> to vector<4x4x2xf32>
    %c25 = arith.constant 25 : index
    %131 = memref.load %arg1[%c25] : memref<48xf32, #tpu.memory_space<smem>>
    %132 = vector.broadcast %131 : f32 to vector<4x4x2xf32>
    %133 = arith.mulf %130, %132 : vector<4x4x2xf32>
    %134 = arith.addf %125, %133 : vector<4x4x2xf32>
    %c37 = arith.constant 37 : index
    %135 = memref.load %arg1[%c37] : memref<48xf32, #tpu.memory_space<smem>>
    %136 = vector.broadcast %135 : f32 to vector<4x4x2xf32>
    %137 = arith.mulf %130, %136 : vector<4x4x2xf32>
    %138 = arith.addf %128, %137 : vector<4x4x2xf32>
    %139 = vector.extract_strided_slice %2 {offsets = [1, 0, 4, 0], sizes = [1, 4, 4, 2], strides = [1, 1, 1, 1]} : vector<2x8x10x2xf32> to vector<1x4x4x2xf32>
    %140 = vector.shape_cast %139 : vector<1x4x4x2xf32> to vector<4x4x2xf32>
    %c26 = arith.constant 26 : index
    %141 = memref.load %arg1[%c26] : memref<48xf32, #tpu.memory_space<smem>>
    %142 = vector.broadcast %141 : f32 to vector<4x4x2xf32>
    %143 = arith.mulf %140, %142 : vector<4x4x2xf32>
    %144 = arith.addf %134, %143 : vector<4x4x2xf32>
    %c38 = arith.constant 38 : index
    %145 = memref.load %arg1[%c38] : memref<48xf32, #tpu.memory_space<smem>>
    %146 = vector.broadcast %145 : f32 to vector<4x4x2xf32>
    %147 = arith.mulf %140, %146 : vector<4x4x2xf32>
    %148 = arith.addf %138, %147 : vector<4x4x2xf32>
    %149 = vector.extract_strided_slice %2 {offsets = [1, 0, 6, 0], sizes = [1, 4, 4, 2], strides = [1, 1, 1, 1]} : vector<2x8x10x2xf32> to vector<1x4x4x2xf32>
    %150 = vector.shape_cast %149 : vector<1x4x4x2xf32> to vector<4x4x2xf32>
    %c27 = arith.constant 27 : index
    %151 = memref.load %arg1[%c27] : memref<48xf32, #tpu.memory_space<smem>>
    %152 = vector.broadcast %151 : f32 to vector<4x4x2xf32>
    %153 = arith.mulf %150, %152 : vector<4x4x2xf32>
    %154 = arith.addf %144, %153 : vector<4x4x2xf32>
    %c39 = arith.constant 39 : index
    %155 = memref.load %arg1[%c39] : memref<48xf32, #tpu.memory_space<smem>>
    %156 = vector.broadcast %155 : f32 to vector<4x4x2xf32>
    %157 = arith.mulf %150, %156 : vector<4x4x2xf32>
    %158 = arith.addf %148, %157 : vector<4x4x2xf32>
    %159 = vector.extract_strided_slice %2 {offsets = [1, 2, 0, 0], sizes = [1, 4, 4, 2], strides = [1, 1, 1, 1]} : vector<2x8x10x2xf32> to vector<1x4x4x2xf32>
    %160 = vector.shape_cast %159 : vector<1x4x4x2xf32> to vector<4x4x2xf32>
    %c28 = arith.constant 28 : index
    %161 = memref.load %arg1[%c28] : memref<48xf32, #tpu.memory_space<smem>>
    %162 = vector.broadcast %161 : f32 to vector<4x4x2xf32>
    %163 = arith.mulf %160, %162 : vector<4x4x2xf32>
    %164 = arith.addf %154, %163 : vector<4x4x2xf32>
    %c40 = arith.constant 40 : index
    %165 = memref.load %arg1[%c40] : memref<48xf32, #tpu.memory_space<smem>>
    %166 = vector.broadcast %165 : f32 to vector<4x4x2xf32>
    %167 = arith.mulf %160, %166 : vector<4x4x2xf32>
    %168 = arith.addf %158, %167 : vector<4x4x2xf32>
    %169 = vector.extract_strided_slice %2 {offsets = [1, 2, 2, 0], sizes = [1, 4, 4, 2], strides = [1, 1, 1, 1]} : vector<2x8x10x2xf32> to vector<1x4x4x2xf32>
    %170 = vector.shape_cast %169 : vector<1x4x4x2xf32> to vector<4x4x2xf32>
    %c29 = arith.constant 29 : index
    %171 = memref.load %arg1[%c29] : memref<48xf32, #tpu.memory_space<smem>>
    %172 = vector.broadcast %171 : f32 to vector<4x4x2xf32>
    %173 = arith.mulf %170, %172 : vector<4x4x2xf32>
    %174 = arith.addf %164, %173 : vector<4x4x2xf32>
    %c41 = arith.constant 41 : index
    %175 = memref.load %arg1[%c41] : memref<48xf32, #tpu.memory_space<smem>>
    %176 = vector.broadcast %175 : f32 to vector<4x4x2xf32>
    %177 = arith.mulf %170, %176 : vector<4x4x2xf32>
    %178 = arith.addf %168, %177 : vector<4x4x2xf32>
    %179 = vector.extract_strided_slice %2 {offsets = [1, 2, 4, 0], sizes = [1, 4, 4, 2], strides = [1, 1, 1, 1]} : vector<2x8x10x2xf32> to vector<1x4x4x2xf32>
    %180 = vector.shape_cast %179 : vector<1x4x4x2xf32> to vector<4x4x2xf32>
    %c30 = arith.constant 30 : index
    %181 = memref.load %arg1[%c30] : memref<48xf32, #tpu.memory_space<smem>>
    %182 = vector.broadcast %181 : f32 to vector<4x4x2xf32>
    %183 = arith.mulf %180, %182 : vector<4x4x2xf32>
    %184 = arith.addf %174, %183 : vector<4x4x2xf32>
    %c42 = arith.constant 42 : index
    %185 = memref.load %arg1[%c42] : memref<48xf32, #tpu.memory_space<smem>>
    %186 = vector.broadcast %185 : f32 to vector<4x4x2xf32>
    %187 = arith.mulf %180, %186 : vector<4x4x2xf32>
    %188 = arith.addf %178, %187 : vector<4x4x2xf32>
    %189 = vector.extract_strided_slice %2 {offsets = [1, 2, 6, 0], sizes = [1, 4, 4, 2], strides = [1, 1, 1, 1]} : vector<2x8x10x2xf32> to vector<1x4x4x2xf32>
    %190 = vector.shape_cast %189 : vector<1x4x4x2xf32> to vector<4x4x2xf32>
    %c31 = arith.constant 31 : index
    %191 = memref.load %arg1[%c31] : memref<48xf32, #tpu.memory_space<smem>>
    %192 = vector.broadcast %191 : f32 to vector<4x4x2xf32>
    %193 = arith.mulf %190, %192 : vector<4x4x2xf32>
    %194 = arith.addf %184, %193 : vector<4x4x2xf32>
    %c43 = arith.constant 43 : index
    %195 = memref.load %arg1[%c43] : memref<48xf32, #tpu.memory_space<smem>>
    %196 = vector.broadcast %195 : f32 to vector<4x4x2xf32>
    %197 = arith.mulf %190, %196 : vector<4x4x2xf32>
    %198 = arith.addf %188, %197 : vector<4x4x2xf32>
    %199 = vector.extract_strided_slice %2 {offsets = [1, 4, 0, 0], sizes = [1, 4, 4, 2], strides = [1, 1, 1, 1]} : vector<2x8x10x2xf32> to vector<1x4x4x2xf32>
    %200 = vector.shape_cast %199 : vector<1x4x4x2xf32> to vector<4x4x2xf32>
    %c32 = arith.constant 32 : index
    %201 = memref.load %arg1[%c32] : memref<48xf32, #tpu.memory_space<smem>>
    %202 = vector.broadcast %201 : f32 to vector<4x4x2xf32>
    %203 = arith.mulf %200, %202 : vector<4x4x2xf32>
    %204 = arith.addf %194, %203 : vector<4x4x2xf32>
    %c44 = arith.constant 44 : index
    %205 = memref.load %arg1[%c44] : memref<48xf32, #tpu.memory_space<smem>>
    %206 = vector.broadcast %205 : f32 to vector<4x4x2xf32>
    %207 = arith.mulf %200, %206 : vector<4x4x2xf32>
    %208 = arith.addf %198, %207 : vector<4x4x2xf32>
    %209 = vector.extract_strided_slice %2 {offsets = [1, 4, 2, 0], sizes = [1, 4, 4, 2], strides = [1, 1, 1, 1]} : vector<2x8x10x2xf32> to vector<1x4x4x2xf32>
    %210 = vector.shape_cast %209 : vector<1x4x4x2xf32> to vector<4x4x2xf32>
    %c33 = arith.constant 33 : index
    %211 = memref.load %arg1[%c33] : memref<48xf32, #tpu.memory_space<smem>>
    %212 = vector.broadcast %211 : f32 to vector<4x4x2xf32>
    %213 = arith.mulf %210, %212 : vector<4x4x2xf32>
    %214 = arith.addf %204, %213 : vector<4x4x2xf32>
    %c45 = arith.constant 45 : index
    %215 = memref.load %arg1[%c45] : memref<48xf32, #tpu.memory_space<smem>>
    %216 = vector.broadcast %215 : f32 to vector<4x4x2xf32>
    %217 = arith.mulf %210, %216 : vector<4x4x2xf32>
    %218 = arith.addf %208, %217 : vector<4x4x2xf32>
    %219 = vector.extract_strided_slice %2 {offsets = [1, 4, 4, 0], sizes = [1, 4, 4, 2], strides = [1, 1, 1, 1]} : vector<2x8x10x2xf32> to vector<1x4x4x2xf32>
    %220 = vector.shape_cast %219 : vector<1x4x4x2xf32> to vector<4x4x2xf32>
    %c34 = arith.constant 34 : index
    %221 = memref.load %arg1[%c34] : memref<48xf32, #tpu.memory_space<smem>>
    %222 = vector.broadcast %221 : f32 to vector<4x4x2xf32>
    %223 = arith.mulf %220, %222 : vector<4x4x2xf32>
    %224 = arith.addf %214, %223 : vector<4x4x2xf32>
    %c46 = arith.constant 46 : index
    %225 = memref.load %arg1[%c46] : memref<48xf32, #tpu.memory_space<smem>>
    %226 = vector.broadcast %225 : f32 to vector<4x4x2xf32>
    %227 = arith.mulf %220, %226 : vector<4x4x2xf32>
    %228 = arith.addf %218, %227 : vector<4x4x2xf32>
    %229 = vector.extract_strided_slice %2 {offsets = [1, 4, 6, 0], sizes = [1, 4, 4, 2], strides = [1, 1, 1, 1]} : vector<2x8x10x2xf32> to vector<1x4x4x2xf32>
    %230 = vector.shape_cast %229 : vector<1x4x4x2xf32> to vector<4x4x2xf32>
    %c35 = arith.constant 35 : index
    %231 = memref.load %arg1[%c35] : memref<48xf32, #tpu.memory_space<smem>>
    %232 = vector.broadcast %231 : f32 to vector<4x4x2xf32>
    %233 = arith.mulf %230, %232 : vector<4x4x2xf32>
    %234 = arith.addf %224, %233 : vector<4x4x2xf32>
    %c47 = arith.constant 47 : index
    %235 = memref.load %arg1[%c47] : memref<48xf32, #tpu.memory_space<smem>>
    %236 = vector.broadcast %235 : f32 to vector<4x4x2xf32>
    %237 = arith.mulf %230, %236 : vector<4x4x2xf32>
    %238 = arith.addf %228, %237 : vector<4x4x2xf32>
    %239 = vector.shape_cast %116 : vector<4x4x2xf32> to vector<1x4x4x2xf32>
    %240 = vector.shape_cast %120 : vector<4x4x2xf32> to vector<1x4x4x2xf32>
    %241 = vector.shape_cast %234 : vector<4x4x2xf32> to vector<1x4x4x2xf32>
    %242 = vector.shape_cast %238 : vector<4x4x2xf32> to vector<1x4x4x2xf32>
    %243 = tpu.concatenate %239, %240, %241, %242 in 0 : vector<1x4x4x2xf32>, vector<1x4x4x2xf32>, vector<1x4x4x2xf32>, vector<1x4x4x2xf32> -> vector<4x4x4x2xf32>
    %c0_4 = arith.constant 0 : index
    %c0_5 = arith.constant 0 : index
    %c0_6 = arith.constant 0 : index
    %c0_7 = arith.constant 0 : index
    %244 = vector.load %arg3[%c0_4, %c0_5, %c0_6, %c0_7] : memref<4x4x4x2xf32, #tpu.memory_space<vmem>>, vector<4x4x4x2xf32>
    %245 = arith.subf %243, %244 : vector<4x4x4x2xf32>
    %c0_8 = arith.constant 0 : index
    %c0_9 = arith.constant 0 : index
    %c0_10 = arith.constant 0 : index
    %c0_11 = arith.constant 0 : index
    %246 = vector.load %arg4[%c0_8, %c0_9, %c0_10, %c0_11] : memref<4x4x4x2xf32, #tpu.memory_space<vmem>>, vector<4x4x4x2xf32>
    tpu.vector_store %arg4[%c0_8, %c0_9, %c0_10, %c0_11], %245 {strides = array<i32>} : memref<4x4x4x2xf32, #tpu.memory_space<vmem>>, vector<4x4x4x2xf32>,
    return
  }
  func.func @transform_0(%arg0: i32, %arg1: memref<48xf32, #tpu.memory_space<smem>>) -> (i32, i32, i32, i32) {
    %c0_i32 = arith.constant 0 : i32
    %c0_i32_0 = arith.constant 0 : i32
    %c0_i32_1 = arith.constant 0 : i32
    %c0_i32_2 = arith.constant 0 : i32
    return %c0_i32, %c0_i32_0, %c0_i32_1, %arg0 : i32, i32, i32, i32
  }
  func.func @transform_1(%arg0: i32, %arg1: memref<48xf32, #tpu.memory_space<smem>>) -> (i32, i32, i32, i32) {
    %c0_i32 = arith.constant 0 : i32
    %c0_i32_0 = arith.constant 0 : i32
    %c0_i32_1 = arith.constant 0 : i32
    %c0_i32_2 = arith.constant 0 : i32
    return %c0_i32, %c0_i32_0, %c0_i32_1, %arg0 : i32, i32, i32, i32
  }
  func.func @transform_2(%arg0: i32, %arg1: memref<48xf32, #tpu.memory_space<smem>>) -> (i32, i32, i32, i32) {
    %c0_i32 = arith.constant 0 : i32
    %c0_i32_0 = arith.constant 0 : i32
    %c0_i32_1 = arith.constant 0 : i32
    %c0_i32_2 = arith.constant 0 : i32
    return %c0_i32, %c0_i32_0, %c0_i32_1, %arg0 : i32, i32, i32, i32
  }
}

</mosaic_0001>

<llo_original>
// kernel: tpu_custom_call.1
$region0: #{tpu_custom_call.1}
  #allocation0 [shape = 'u32[]', space=smem, size = 0x4, offset = 0x4, fixed_abs, tag = 'smem constant byte address 0x4 - core index']
  #allocation1 [shape = 'u32[72,128]{1,0:T(1,128)}', space=vmem, size = 0x9000, scoped, tag = 'internal scratch']
  #allocation2 [shape = 's32[1]{0}', space=sflag, size = 0x4, scoped, tag = 'scoped memory for tpu_custom_call.1']
  #allocation3 [shape = 'u8[512]{0}', space=smem, size = 0x200, scoped, tag = 'prefetched SMEM operand 0']
  %s0 = inlined_call_operand.vmem [shape: f32[48], index: 0, kind: input, shape index: {}]
  %s1 = inlined_call_operand.vmem [shape: f32[2,2,10,2], index: 1, kind: input, shape index: {}]
  %s2 = inlined_call_operand.vmem [shape: f32[4,4,4,2], index: 2, kind: input, shape index: {}]
  %s3 = inlined_call_operand.vmem [shape: f32[4,4,4,2], index: 3, kind: output, shape index: {}]
  %s4 = sld [smem:[#allocation0]]
  $region18: #{tpu_custom_call.1} parent=0
    _
  %s6 = ssub.s32 1, %s4
  %s7 = scalar_select 0, %s6, %s4
  %s9 = sshll.u32 %s0, 4
  %s10 = int_to_ptr.vmem [resolvable:$true] %s9
  %12 = dma.vmem_to_smem %s10, 16, [#allocation3], [#allocation2]
  %14 = dma.done [#allocation2], 16
  %15 = sfence
  // Predicated region
  $region2: #{tpu_custom_call.1} parent=0 // pred_check
    _
  $region3: #{tpu_custom_call.1} parent=0 // pred_check_branch
    %17 = sbr.rel (0) target = $region5
  $region4: #{tpu_custom_call.1} parent=0 // pred_region
    _
  $region5: #{tpu_custom_call.1} parent=0 // pred_fallthru
    _
  // Predicated region
  $region6: #{tpu_custom_call.1} parent=0 // pred_check
    _
  $region7: #{tpu_custom_call.1} parent=0 // pred_check_branch
    %19 = sbr.rel (0) target = $region9
  $region8: #{tpu_custom_call.1} parent=0 // pred_region
    _
  $region9: #{tpu_custom_call.1} parent=0 // pred_fallthru
    _
  %v20 = vld [vmem:[%s1] sm:$0xff]
  %v21 = vld [vmem:[%s1 + $0x8] sm:$0x3]
  %v22 = vld [vmem:[%s1 + $0x10] sm:$0xff]
  %v23 = vld [vmem:[%s1 + $0x18] sm:$0x3]
  %v24 = vld [vmem:[%s1 + $0x20] sm:$0xff]
  %v25 = vld [vmem:[%s1 + $0x28] sm:$0x3]
  %v26 = vld [vmem:[%s1 + $0x30] sm:$0xff]
  %v27 = vld [vmem:[%s1 + $0x38] sm:$0x3]
  %s28 = sld [smem:[#allocation3]]
  %v29 = vstv %s28
  %v30 = vmul.f32 %v29, 0.0
  %v31 = vmul.f32 %v20, %v29
  %s32 = sld [smem:[#allocation3 + $0xc]]
  %v33 = vstv %s32
  %v34 = vmul.f32 %v33, 0.0
  %v35 = vmul.f32 %v20, %v33
  %s36 = sld [smem:[#allocation3 + $0x1]]
  %v37 = vstv %s36
  %v38 = vmul.f32 %v37, 0.0
  %v39 = vmul.f32 %v20, %v37
  %v42 = vrot.slane %v38, 2
  %v43 = vrot.slane %v39, 2
  %v46 = vadd.f32 %v30, %v42
  %v47 = vadd.f32 %v31, %v43
  %s48 = sld [smem:[#allocation3 + $0xd]]
  %v49 = vstv %s48
  %v50 = vmul.f32 %v49, 0.0
  %v51 = vmul.f32 %v20, %v49
  %v54 = vrot.slane %v50, 2
  %v55 = vrot.slane %v51, 2
  %v58 = vadd.f32 %v34, %v54
  %v59 = vadd.f32 %v35, %v55
  %s60 = sld [smem:[#allocation3 + $0x2]]
  %v61 = vstv %s60
  %v62 = vmul.f32 %v61, 0.0
  %v63 = vmul.f32 %v20, %v61
  %v66 = vrot.slane %v62, 4
  %v67 = vrot.slane %v63, 4
  %v70 = vadd.f32 %v46, %v66
  %v71 = vadd.f32 %v47, %v67
  %s72 = sld [smem:[#allocation3 + $0xe]]
  %v73 = vstv %s72
  %v74 = vmul.f32 %v73, 0.0
  %v75 = vmul.f32 %v20, %v73
  %v78 = vrot.slane %v74, 4
  %v79 = vrot.slane %v75, 4
  %v82 = vadd.f32 %v58, %v78
  %v83 = vadd.f32 %v59, %v79
  %s84 = sld [smem:[#allocation3 + $0x3]]
  %v85 = vstv %s84
  %v86 = vmul.f32 %v85, 0.0
  %v87 = vmul.f32 %v20, %v85
  %v88 = vmul.f32 %v21, %v85
  %vm92 = vcmask 1041408
  %v93 = vrot.slane %v86, 6
  %v94 = vsel %vm92, %v93, %v93
  %v95 = vrot.slane %v87, 6
  %v96 = vrot.slane %v88, 6
  %v97 = vsel %vm92, %v95, %v96
  %v100 = vadd.f32 %v70, %v94
  %v101 = vadd.f32 %v71, %v97
  %s102 = sld [smem:[#allocation3 + $0xf]]
  %v103 = vstv %s102
  %v104 = vmul.f32 %v103, 0.0
  %v105 = vmul.f32 %v20, %v103
  %v106 = vmul.f32 %v21, %v103
  %v110 = vrot.slane %v104, 6
  %v111 = vsel %vm92, %v110, %v110
  %v112 = vrot.slane %v105, 6
  %v113 = vrot.slane %v106, 6
  %v114 = vsel %vm92, %v112, %v113
  %v117 = vadd.f32 %v82, %v111
  %v118 = vadd.f32 %v83, %v114
  %s119 = sld [smem:[#allocation3 + $0x4]]
  %v120 = vstv %s119
  %v121 = vmul.f32 %v120, 0.0
  %v122 = vmul.f32 %v20, %v120
  %v123 = vmul.f32 %v22, %v120
  %v124 = vadd.f32 %v100, %v121
  %v125 = vadd.f32 %v100, %v122
  %v126 = vadd.f32 %v100, %v123
  %v127 = vadd.f32 %v101, %v121
  %s128 = sld [smem:[#allocation3 + $0x10]]
  %v129 = vstv %s128
  %v130 = vmul.f32 %v129, 0.0
  %v131 = vmul.f32 %v20, %v129
  %v132 = vmul.f32 %v22, %v129
  %v133 = vadd.f32 %v117, %v130
  %v134 = vadd.f32 %v117, %v131
  %v135 = vadd.f32 %v117, %v132
  %v136 = vadd.f32 %v118, %v130
  %s137 = sld [smem:[#allocation3 + $0x5]]
  %v138 = vstv %s137
  %v139 = vmul.f32 %v138, 0.0
  %v140 = vmul.f32 %v20, %v138
  %v141 = vmul.f32 %v22, %v138
  %v145 = vrot.slane %v139, 2
  %v146 = vrot.slane %v140, 2
  %v147 = vrot.slane %v141, 2
  %v151 = vadd.f32 %v124, %v145
  %v152 = vadd.f32 %v125, %v146
  %v153 = vadd.f32 %v126, %v147
  %v154 = vadd.f32 %v127, %v145
  %s155 = sld [smem:[#allocation3 + $0x11]]
  %v156 = vstv %s155
  %v157 = vmul.f32 %v156, 0.0
  %v158 = vmul.f32 %v20, %v156
  %v159 = vmul.f32 %v22, %v156
  %v163 = vrot.slane %v157, 2
  %v164 = vrot.slane %v158, 2
  %v165 = vrot.slane %v159, 2
  %v169 = vadd.f32 %v133, %v163
  %v170 = vadd.f32 %v134, %v164
  %v171 = vadd.f32 %v135, %v165
  %v172 = vadd.f32 %v136, %v163
  %s173 = sld [smem:[#allocation3 + $0x6]]
  %v174 = vstv %s173
  %v175 = vmul.f32 %v174, 0.0
  %v176 = vmul.f32 %v20, %v174
  %v177 = vmul.f32 %v22, %v174
  %v181 = vrot.slane %v175, 4
  %v182 = vrot.slane %v176, 4
  %v183 = vrot.slane %v177, 4
  %v187 = vadd.f32 %v151, %v181
  %v188 = vadd.f32 %v152, %v182
  %v189 = vadd.f32 %v153, %v183
  %v190 = vadd.f32 %v154, %v181
  %s191 = sld [smem:[#allocation3 + $0x12]]
  %v192 = vstv %s191
  %v193 = vmul.f32 %v192, 0.0
  %v194 = vmul.f32 %v20, %v192
  %v195 = vmul.f32 %v22, %v192
  %v199 = vrot.slane %v193, 4
  %v200 = vrot.slane %v194, 4
  %v201 = vrot.slane %v195, 4
  %v205 = vadd.f32 %v169, %v199
  %v206 = vadd.f32 %v170, %v200
  %v207 = vadd.f32 %v171, %v201
  %v208 = vadd.f32 %v172, %v199
  %s209 = sld [smem:[#allocation3 + $0x7]]
  %v210 = vstv %s209
  %v211 = vmul.f32 %v210, 0.0
  %v212 = vmul.f32 %v20, %v210
  %v213 = vmul.f32 %v21, %v210
  %v214 = vmul.f32 %v22, %v210
  %v215 = vmul.f32 %v23, %v210
  %v221 = vrot.slane %v211, 6
  %v222 = vsel %vm92, %v221, %v221
  %v223 = vrot.slane %v212, 6
  %v224 = vrot.slane %v213, 6
  %v225 = vsel %vm92, %v223, %v224
  %v226 = vrot.slane %v214, 6
  %v227 = vrot.slane %v215, 6
  %v228 = vsel %vm92, %v226, %v227
  %v232 = vadd.f32 %v187, %v222
  %v233 = vadd.f32 %v188, %v225
  %v234 = vadd.f32 %v189, %v228
  %v235 = vadd.f32 %v190, %v222
  %s236 = sld [smem:[#allocation3 + $0x13]]
  %v237 = vstv %s236
  %v238 = vmul.f32 %v237, 0.0
  %v239 = vmul.f32 %v20, %v237
  %v240 = vmul.f32 %v21, %v237
  %v241 = vmul.f32 %v22, %v237
  %v242 = vmul.f32 %v23, %v237
  %v248 = vrot.slane %v238, 6
  %v249 = vsel %vm92, %v248, %v248
  %v250 = vrot.slane %v239, 6
  %v251 = vrot.slane %v240, 6
  %v252 = vsel %vm92, %v250, %v251
  %v253 = vrot.slane %v241, 6
  %v254 = vrot.slane %v242, 6
  %v255 = vsel %vm92, %v253, %v254
  %v259 = vadd.f32 %v205, %v249
  %v260 = vadd.f32 %v206, %v252
  %v261 = vadd.f32 %v207, %v255
  %v262 = vadd.f32 %v208, %v249
  %s263 = sld [smem:[#allocation3 + $0x8]]
  %v264 = vstv %s263
  %v265 = vmul.f32 %v22, %v264
  %v266 = vmul.f32 %v264, 0.0
  %v267 = vadd.f32 %v232, %v265
  %v268 = vadd.f32 %v233, %v266
  %v269 = vadd.f32 %v234, %v266
  %v270 = vadd.f32 %v235, %v266
  %s271 = sld [smem:[#allocation3 + $0x14]]
  %v272 = vstv %s271
  %v273 = vmul.f32 %v22, %v272
  %v274 = vmul.f32 %v272, 0.0
  %v275 = vadd.f32 %v259, %v273
  %v276 = vadd.f32 %v260, %v274
  %v277 = vadd.f32 %v261, %v274
  %v278 = vadd.f32 %v262, %v274
  %s279 = sld [smem:[#allocation3 + $0x9]]
  %v280 = vstv %s279
  %v281 = vmul.f32 %v22, %v280
  %v282 = vmul.f32 %v280, 0.0
  %v285 = vrot.slane %v281, 2
  %v286 = vrot.slane %v282, 2
  %v289 = vadd.f32 %v267, %v285
  %v290 = vadd.f32 %v268, %v286
  %v291 = vadd.f32 %v269, %v286
  %v292 = vadd.f32 %v270, %v286
  %s293 = sld [smem:[#allocation3 + $0x15]]
  %v294 = vstv %s293
  %v295 = vmul.f32 %v22, %v294
  %v296 = vmul.f32 %v294, 0.0
  %v299 = vrot.slane %v295, 2
  %v300 = vrot.slane %v296, 2
  %v303 = vadd.f32 %v275, %v299
  %v304 = vadd.f32 %v276, %v300
  %v305 = vadd.f32 %v277, %v300
  %v306 = vadd.f32 %v278, %v300
  %s307 = sld [smem:[#allocation3 + $0xa]]
  %v308 = vstv %s307
  %v309 = vmul.f32 %v22, %v308
  %v310 = vmul.f32 %v308, 0.0
  %v313 = vrot.slane %v309, 4
  %v314 = vrot.slane %v310, 4
  %v317 = vadd.f32 %v289, %v313
  %v318 = vadd.f32 %v290, %v314
  %v319 = vadd.f32 %v291, %v314
  %v320 = vadd.f32 %v292, %v314
  %s321 = sld [smem:[#allocation3 + $0x16]]
  %v322 = vstv %s321
  %v323 = vmul.f32 %v22, %v322
  %v324 = vmul.f32 %v322, 0.0
  %v327 = vrot.slane %v323, 4
  %v328 = vrot.slane %v324, 4
  %v331 = vadd.f32 %v303, %v327
  %v332 = vadd.f32 %v304, %v328
  %v333 = vadd.f32 %v305, %v328
  %v334 = vadd.f32 %v306, %v328
  %s335 = sld [smem:[#allocation3 + $0xb]]
  %v336 = vstv %s335
  %v337 = vmul.f32 %v22, %v336
  %v338 = vmul.f32 %v23, %v336
  %v339 = vmul.f32 %v336, 0.0
  %v343 = vrot.slane %v337, 6
  %v344 = vrot.slane %v338, 6
  %v345 = vsel %vm92, %v343, %v344
  %v346 = vrot.slane %v339, 6
  %v347 = vsel %vm92, %v346, %v346
  %v350 = vadd.f32 %v317, %v345
  %v351 = vadd.f32 %v318, %v347
  %v352 = vadd.f32 %v319, %v347
  %v353 = vadd.f32 %v320, %v347
  %s354 = sld [smem:[#allocation3 + $0x17]]
  %v355 = vstv %s354
  %v356 = vmul.f32 %v22, %v355
  %v357 = vmul.f32 %v23, %v355
  %v358 = vmul.f32 %v355, 0.0
  %v362 = vrot.slane %v356, 6
  %v363 = vrot.slane %v357, 6
  %v364 = vsel %vm92, %v362, %v363
  %v365 = vrot.slane %v358, 6
  %v366 = vsel %vm92, %v365, %v365
  %v369 = vadd.f32 %v331, %v364
  %v370 = vadd.f32 %v332, %v366
  %v371 = vadd.f32 %v333, %v366
  %v372 = vadd.f32 %v334, %v366
  %s373 = sld [smem:[#allocation3 + $0x18]]
  %v374 = vstv %s373
  %v375 = vmul.f32 %v374, 0.0
  %v376 = vmul.f32 %v24, %v374
  %s377 = sld [smem:[#allocation3 + $0x24]]
  %v378 = vstv %s377
  %v379 = vmul.f32 %v378, 0.0
  %v380 = vmul.f32 %v24, %v378
  %s381 = sld [smem:[#allocation3 + $0x19]]
  %v382 = vstv %s381
  %v383 = vmul.f32 %v382, 0.0
  %v384 = vmul.f32 %v24, %v382
  %v387 = vrot.slane %v383, 2
  %v388 = vrot.slane %v384, 2
  %v391 = vadd.f32 %v375, %v387
  %v392 = vadd.f32 %v376, %v388
  %s393 = sld [smem:[#allocation3 + $0x25]]
  %v394 = vstv %s393
  %v395 = vmul.f32 %v394, 0.0
  %v396 = vmul.f32 %v24, %v394
  %v399 = vrot.slane %v395, 2
  %v400 = vrot.slane %v396, 2
  %v403 = vadd.f32 %v379, %v399
  %v404 = vadd.f32 %v380, %v400
  %s405 = sld [smem:[#allocation3 + $0x1a]]
  %v406 = vstv %s405
  %v407 = vmul.f32 %v406, 0.0
  %v408 = vmul.f32 %v24, %v406
  %v411 = vrot.slane %v407, 4
  %v412 = vrot.slane %v408, 4
  %v415 = vadd.f32 %v391, %v411
  %v416 = vadd.f32 %v392, %v412
  %s417 = sld [smem:[#allocation3 + $0x26]]
  %v418 = vstv %s417
  %v419 = vmul.f32 %v418, 0.0
  %v420 = vmul.f32 %v24, %v418
  %v423 = vrot.slane %v419, 4
  %v424 = vrot.slane %v420, 4
  %v427 = vadd.f32 %v403, %v423
  %v428 = vadd.f32 %v404, %v424
  %s429 = sld [smem:[#allocation3 + $0x1b]]
  %v430 = vstv %s429
  %v431 = vmul.f32 %v430, 0.0
  %v432 = vmul.f32 %v24, %v430
  %v433 = vmul.f32 %v25, %v430
  %v437 = vrot.slane %v431, 6
  %v438 = vsel %vm92, %v437, %v437
  %v439 = vrot.slane %v432, 6
  %v440 = vrot.slane %v433, 6
  %v441 = vsel %vm92, %v439, %v440
  %v444 = vadd.f32 %v415, %v438
  %v445 = vadd.f32 %v416, %v441
  %s446 = sld [smem:[#allocation3 + $0x27]]
  %v447 = vstv %s446
  %v448 = vmul.f32 %v447, 0.0
  %v449 = vmul.f32 %v24, %v447
  %v450 = vmul.f32 %v25, %v447
  %v454 = vrot.slane %v448, 6
  %v455 = vsel %vm92, %v454, %v454
  %v456 = vrot.slane %v449, 6
  %v457 = vrot.slane %v450, 6
  %v458 = vsel %vm92, %v456, %v457
  %v461 = vadd.f32 %v427, %v455
  %v462 = vadd.f32 %v428, %v458
  %s463 = sld [smem:[#allocation3 + $0x1c]]
  %v464 = vstv %s463
  %v465 = vmul.f32 %v464, 0.0
  %v466 = vmul.f32 %v24, %v464
  %v467 = vmul.f32 %v26, %v464
  %v468 = vadd.f32 %v444, %v465
  %v469 = vadd.f32 %v444, %v466
  %v470 = vadd.f32 %v444, %v467
  %v471 = vadd.f32 %v445, %v465
  %s472 = sld [smem:[#allocation3 + $0x28]]
  %v473 = vstv %s472
  %v474 = vmul.f32 %v473, 0.0
  %v475 = vmul.f32 %v24, %v473
  %v476 = vmul.f32 %v26, %v473
  %v477 = vadd.f32 %v461, %v474
  %v478 = vadd.f32 %v461, %v475
  %v479 = vadd.f32 %v461, %v476
  %v480 = vadd.f32 %v462, %v474
  %s481 = sld [smem:[#allocation3 + $0x1d]]
  %v482 = vstv %s481
  %v483 = vmul.f32 %v482, 0.0
  %v484 = vmul.f32 %v24, %v482
  %v485 = vmul.f32 %v26, %v482
  %v489 = vrot.slane %v483, 2
  %v490 = vrot.slane %v484, 2
  %v491 = vrot.slane %v485, 2
  %v495 = vadd.f32 %v468, %v489
  %v496 = vadd.f32 %v469, %v490
  %v497 = vadd.f32 %v470, %v491
  %v498 = vadd.f32 %v471, %v489
  %s499 = sld [smem:[#allocation3 + $0x29]]
  %v500 = vstv %s499
  %v501 = vmul.f32 %v500, 0.0
  %v502 = vmul.f32 %v24, %v500
  %v503 = vmul.f32 %v26, %v500
  %v507 = vrot.slane %v501, 2
  %v508 = vrot.slane %v502, 2
  %v509 = vrot.slane %v503, 2
  %v513 = vadd.f32 %v477, %v507
  %v514 = vadd.f32 %v478, %v508
  %v515 = vadd.f32 %v479, %v509
  %v516 = vadd.f32 %v480, %v507
  %s517 = sld [smem:[#allocation3 + $0x1e]]
  %v518 = vstv %s517
  %v519 = vmul.f32 %v518, 0.0
  %v520 = vmul.f32 %v24, %v518
  %v521 = vmul.f32 %v26, %v518
  %v525 = vrot.slane %v519, 4
  %v526 = vrot.slane %v520, 4
  %v527 = vrot.slane %v521, 4
  %v531 = vadd.f32 %v495, %v525
  %v532 = vadd.f32 %v496, %v526
  %v533 = vadd.f32 %v497, %v527
  %v534 = vadd.f32 %v498, %v525
  %s535 = sld [smem:[#allocation3 + $0x2a]]
  %v536 = vstv %s535
  %v537 = vmul.f32 %v536, 0.0
  %v538 = vmul.f32 %v24, %v536
  %v539 = vmul.f32 %v26, %v536
  %v543 = vrot.slane %v537, 4
  %v544 = vrot.slane %v538, 4
  %v545 = vrot.slane %v539, 4
  %v549 = vadd.f32 %v513, %v543
  %v550 = vadd.f32 %v514, %v544
  %v551 = vadd.f32 %v515, %v545
  %v552 = vadd.f32 %v516, %v543
  %s553 = sld [smem:[#allocation3 + $0x1f]]
  %v554 = vstv %s553
  %v555 = vmul.f32 %v554, 0.0
  %v556 = vmul.f32 %v24, %v554
  %v557 = vmul.f32 %v25, %v554
  %v558 = vmul.f32 %v26, %v554
  %v559 = vmul.f32 %v27, %v554
  %v565 = vrot.slane %v555, 6
  %v566 = vsel %vm92, %v565, %v565
  %v567 = vrot.slane %v556, 6
  %v568 = vrot.slane %v557, 6
  %v569 = vsel %vm92, %v567, %v568
  %v570 = vrot.slane %v558, 6
  %v571 = vrot.slane %v559, 6
  %v572 = vsel %vm92, %v570, %v571
  %v576 = vadd.f32 %v531, %v566
  %v577 = vadd.f32 %v532, %v569
  %v578 = vadd.f32 %v533, %v572
  %v579 = vadd.f32 %v534, %v566
  %s580 = sld [smem:[#allocation3 + $0x2b]]
  %v581 = vstv %s580
  %v582 = vmul.f32 %v581, 0.0
  %v583 = vmul.f32 %v24, %v581
  %v584 = vmul.f32 %v25, %v581
  %v585 = vmul.f32 %v26, %v581
  %v586 = vmul.f32 %v27, %v581
  %v592 = vrot.slane %v582, 6
  %v593 = vsel %vm92, %v592, %v592
  %v594 = vrot.slane %v583, 6
  %v595 = vrot.slane %v584, 6
  %v596 = vsel %vm92, %v594, %v595
  %v597 = vrot.slane %v585, 6
  %v598 = vrot.slane %v586, 6
  %v599 = vsel %vm92, %v597, %v598
  %v603 = vadd.f32 %v549, %v593
  %v604 = vadd.f32 %v550, %v596
  %v605 = vadd.f32 %v551, %v599
  %v606 = vadd.f32 %v552, %v593
  %s607 = sld [smem:[#allocation3 + $0x20]]
  %v608 = vstv %s607
  %v609 = vmul.f32 %v26, %v608
  %v610 = vmul.f32 %v608, 0.0
  %v611 = vadd.f32 %v576, %v609
  %v612 = vadd.f32 %v577, %v610
  %v613 = vadd.f32 %v578, %v610
  %v614 = vadd.f32 %v579, %v610
  %s615 = sld [smem:[#allocation3 + $0x2c]]
  %v616 = vstv %s615
  %v617 = vmul.f32 %v26, %v616
  %v618 = vmul.f32 %v616, 0.0
  %v619 = vadd.f32 %v603, %v617
  %v620 = vadd.f32 %v604, %v618
  %v621 = vadd.f32 %v605, %v618
  %v622 = vadd.f32 %v606, %v618
  %s623 = sld [smem:[#allocation3 + $0x21]]
  %v624 = vstv %s623
  %v625 = vmul.f32 %v26, %v624
  %v626 = vmul.f32 %v624, 0.0
  %v629 = vrot.slane %v625, 2
  %v630 = vrot.slane %v626, 2
  %v633 = vadd.f32 %v611, %v629
  %v634 = vadd.f32 %v612, %v630
  %v635 = vadd.f32 %v613, %v630
  %v636 = vadd.f32 %v614, %v630
  %s637 = sld [smem:[#allocation3 + $0x2d]]
  %v638 = vstv %s637
  %v639 = vmul.f32 %v26, %v638
  %v640 = vmul.f32 %v638, 0.0
  %v643 = vrot.slane %v639, 2
  %v644 = vrot.slane %v640, 2
  %v647 = vadd.f32 %v619, %v643
  %v648 = vadd.f32 %v620, %v644
  %v649 = vadd.f32 %v621, %v644
  %v650 = vadd.f32 %v622, %v644
  %s651 = sld [smem:[#allocation3 + $0x22]]
  %v652 = vstv %s651
  %v653 = vmul.f32 %v26, %v652
  %v654 = vmul.f32 %v652, 0.0
  %v657 = vrot.slane %v653, 4
  %v658 = vrot.slane %v654, 4
  %v661 = vadd.f32 %v633, %v657
  %v662 = vadd.f32 %v634, %v658
  %v663 = vadd.f32 %v635, %v658
  %v664 = vadd.f32 %v636, %v658
  %s665 = sld [smem:[#allocation3 + $0x2e]]
  %v666 = vstv %s665
  %v667 = vmul.f32 %v26, %v666
  %v668 = vmul.f32 %v666, 0.0
  %v671 = vrot.slane %v667, 4
  %v672 = vrot.slane %v668, 4
  %v675 = vadd.f32 %v647, %v671
  %v676 = vadd.f32 %v648, %v672
  %v677 = vadd.f32 %v649, %v672
  %v678 = vadd.f32 %v650, %v672
  %s679 = sld [smem:[#allocation3 + $0x23]]
  %v680 = vstv %s679
  %v681 = vmul.f32 %v26, %v680
  %v682 = vmul.f32 %v27, %v680
  %v683 = vmul.f32 %v680, 0.0
  %v687 = vrot.slane %v681, 6
  %v688 = vrot.slane %v682, 6
  %v689 = vsel %vm92, %v687, %v688
  %v690 = vrot.slane %v683, 6
  %v691 = vsel %vm92, %v690, %v690
  %v694 = vadd.f32 %v661, %v689
  %v695 = vadd.f32 %v662, %v691
  %v696 = vadd.f32 %v663, %v691
  %v697 = vadd.f32 %v664, %v691
  %s698 = sld [smem:[#allocation3 + $0x2f]]
  %v699 = vstv %s698
  %v700 = vmul.f32 %v26, %v699
  %v701 = vmul.f32 %v27, %v699
  %v702 = vmul.f32 %v699, 0.0
  %v706 = vrot.slane %v700, 6
  %v707 = vrot.slane %v701, 6
  %v708 = vsel %vm92, %v706, %v707
  %v709 = vrot.slane %v702, 6
  %v710 = vsel %vm92, %v709, %v709
  %v713 = vadd.f32 %v675, %v708
  %v714 = vadd.f32 %v676, %v710
  %v715 = vadd.f32 %v677, %v710
  %v716 = vadd.f32 %v678, %v710
  %v717 = vld [vmem:[%s2] sm:$0xf]
  %v718 = vld [vmem:[%s2 + $0x4] sm:$0xf]
  %v719 = vld [vmem:[%s2 + $0x8] sm:$0xf]
  %v720 = vld [vmem:[%s2 + $0xc] sm:$0xf]
  %v721 = vld [vmem:[%s2 + $0x10] sm:$0xf]
  %v722 = vld [vmem:[%s2 + $0x14] sm:$0xf]
  %v723 = vld [vmem:[%s2 + $0x18] sm:$0xf]
  %v724 = vld [vmem:[%s2 + $0x1c] sm:$0xf]
  %v725 = vld [vmem:[%s2 + $0x20] sm:$0xf]
  %v726 = vld [vmem:[%s2 + $0x24] sm:$0xf]
  %v727 = vld [vmem:[%s2 + $0x28] sm:$0xf]
  %v728 = vld [vmem:[%s2 + $0x2c] sm:$0xf]
  %v729 = vld [vmem:[%s2 + $0x30] sm:$0xf]
  %v730 = vld [vmem:[%s2 + $0x34] sm:$0xf]
  %v731 = vld [vmem:[%s2 + $0x38] sm:$0xf]
  %v732 = vld [vmem:[%s2 + $0x3c] sm:$0xf]
  %v733 = vsub.f32 %v350, %v717
  %v734 = vsub.f32 %v351, %v718
  %v735 = vsub.f32 %v352, %v719
  %v736 = vsub.f32 %v353, %v720
  %v737 = vsub.f32 %v369, %v721
  %v738 = vsub.f32 %v370, %v722
  %v739 = vsub.f32 %v371, %v723
  %v740 = vsub.f32 %v372, %v724
  %v741 = vsub.f32 %v694, %v725
  %v742 = vsub.f32 %v695, %v726
  %v743 = vsub.f32 %v696, %v727
  %v744 = vsub.f32 %v697, %v728
  %v745 = vsub.f32 %v713, %v729
  %v746 = vsub.f32 %v714, %v730
  %v747 = vsub.f32 %v715, %v731
  %v748 = vsub.f32 %v716, %v732
  %vm749 = vcmask 11264
  %750 = vst.msk [vmem:[%s3] sm:$0xf] %vm749, %v733
  %751 = vst.msk [vmem:[%s3 + $0x4] sm:$0xf] %vm749, %v734
  %752 = vst.msk [vmem:[%s3 + $0x8] sm:$0xf] %vm749, %v735
  %753 = vst.msk [vmem:[%s3 + $0xc] sm:$0xf] %vm749, %v736
  %754 = vst.msk [vmem:[%s3 + $0x10] sm:$0xf] %vm749, %v737
  %755 = vst.msk [vmem:[%s3 + $0x14] sm:$0xf] %vm749, %v738
  %756 = vst.msk [vmem:[%s3 + $0x18] sm:$0xf] %vm749, %v739
  %757 = vst.msk [vmem:[%s3 + $0x1c] sm:$0xf] %vm749, %v740
  %758 = vst.msk [vmem:[%s3 + $0x20] sm:$0xf] %vm749, %v741
  %759 = vst.msk [vmem:[%s3 + $0x24] sm:$0xf] %vm749, %v742
  %760 = vst.msk [vmem:[%s3 + $0x28] sm:$0xf] %vm749, %v743
  %761 = vst.msk [vmem:[%s3 + $0x2c] sm:$0xf] %vm749, %v744
  %762 = vst.msk [vmem:[%s3 + $0x30] sm:$0xf] %vm749, %v745
  %763 = vst.msk [vmem:[%s3 + $0x34] sm:$0xf] %vm749, %v746
  %764 = vst.msk [vmem:[%s3 + $0x38] sm:$0xf] %vm749, %v747
  %765 = vst.msk [vmem:[%s3 + $0x3c] sm:$0xf] %vm749, %v748
  // Predicated region
  $region10: #{tpu_custom_call.1} parent=0 // pred_check
    _
  $region11: #{tpu_custom_call.1} parent=0 // pred_check_branch
    %767 = sbr.rel (0) target = $region13
  $region12: #{tpu_custom_call.1} parent=0 // pred_region
    _
  $region13: #{tpu_custom_call.1} parent=0 // pred_fallthru
    _
  // Predicated region
  $region14: #{tpu_custom_call.1} parent=0 // pred_check
    _
  $region15: #{tpu_custom_call.1} parent=0 // pred_check_branch
    %769 = sbr.rel (0) target = $region17
  $region16: #{tpu_custom_call.1} parent=0 // pred_region
    _
  $region17: #{tpu_custom_call.1} parent=0 // pred_fallthru
    _

</llo_original>
